<compile_context>
chip_gen: v7x
topology: tpu7x:2x2x1
jax: 0.10.0
libtpu: 0.0.40
codegen_flags: <defaults>
</compile_context>

<pallas_src>
import functools
import math

import jax
import jax.numpy as jnp
from jax.experimental import pallas as pl
from jax.experimental.pallas import tpu as pltpu

SUBLANE = 8    # f32 sublane tile
LANE = 128     # lane tile


def _round_up(x, m):
    return (x + m - 1) // m * m


# ----------------------------- Pallas kernel --------------------------------


def _gru_encoder_kernel(x_ref, h0_ref, wih_ref, whh_ref, bih_ref, bhh_ref,
                        out_ref, h_scr):
    """One grid step == one GRU timestep.

    x_ref   : (1, Bp, E)    embedded input for this timestep
    h0_ref  : (Bp, Hp)      initial hidden (resident: constant index map)
    wih_ref : (E, 3*Hp)     W_ih^T, gate order (r, z, n), each gate lane-aligned
    whh_ref : (Hp, 3*Hp)    W_hh^T
    b*_ref  : (1, 3*Hp)     biases
    out_ref : (1, Bp, Hp)   hidden output for this timestep
    h_scr   : (Bp, Hp)      VMEM scratch carrying h across grid steps
    """
    t = pl.program_id(0)

    @pl.when(t == 0)
    def _():
        h_scr[...] = h0_ref[...]

    x = x_ref[0]          # (Bp, E)
    h = h_scr[...]        # (Bp, Hp)
    Hp = h.shape[-1]

    gi = jnp.dot(x, wih_ref[...], preferred_element_type=jnp.float32) + bih_ref[...]
    gh = jnp.dot(h, whh_ref[...], preferred_element_type=jnp.float32) + bhh_ref[...]

    # Gate slices at lane offsets 0, Hp, 2*Hp (all multiples of 128): pure
    # per-vreg VPU/EUP work, no cross-lane shuffles.
    i_r, i_z, i_n = gi[:, :Hp], gi[:, Hp:2 * Hp], gi[:, 2 * Hp:]
    h_r, h_z, h_n = gh[:, :Hp], gh[:, Hp:2 * Hp], gh[:, 2 * Hp:]

    r = jax.nn.sigmoid(i_r + h_r)
    z = jax.nn.sigmoid(i_z + h_z)
    n = jnp.tanh(i_n + r * h_n)
    h_new = (1.0 - z) * n + z * h

    h_scr[...] = h_new
    out_ref[0] = h_new


def _gru_scan(x_emb, h0p, wih_t, whh_t, bih, bhh):
    """x_emb: (S, Bp, E) f32,  h0p: (Bp, Hp) f32  ->  (S, Bp, Hp) f32."""
    S, Bp, E = x_emb.shape
    Hp = h0p.shape[-1]
    return pl.pallas_call(
        _gru_encoder_kernel,
        out_shape=jax.ShapeDtypeStruct((S, Bp, Hp), jnp.float32),
        grid_spec=pltpu.PrefetchScalarGridSpec(
            num_scalar_prefetch=0,
            grid=(S,),
            in_specs=[
                pl.BlockSpec((1, Bp, E), lambda t: (t, 0, 0)),       # x_t
                pl.BlockSpec((Bp, Hp), lambda t: (0, 0)),            # h0 (resident)
                pl.BlockSpec((E, 3 * Hp), lambda t: (0, 0)),         # W_ih^T (resident)
                pl.BlockSpec((Hp, 3 * Hp), lambda t: (0, 0)),        # W_hh^T (resident)
                pl.BlockSpec((1, 3 * Hp), lambda t: (0, 0)),         # b_ih
                pl.BlockSpec((1, 3 * Hp), lambda t: (0, 0)),         # b_hh
            ],
            out_specs=pl.BlockSpec((1, Bp, Hp), lambda t: (t, 0, 0)),
            scratch_shapes=[pltpu.VMEM((Bp, Hp), jnp.float32)],
        ),
        compiler_params=pltpu.CompilerParams(
            # time axis carries the recurrence -> sequential
            dimension_semantics=("arbitrary",),
        ),
    )(x_emb, h0p, wih_t, whh_t, bih, bhh)


# --------------------------- params & packing -------------------------------


def init_encoder_params(key, vocab_size, embed_dim, hidden_size):
    """Raw params in PyTorch layout: W_ih (3H,E), W_hh (3H,H), b_* (3H,)."""
    k = 1.0 / math.sqrt(hidden_size)
    ks = jax.random.split(key, 5)

    def u(kk, shape):
        return jax.random.uniform(kk, shape, jnp.float32, -k, k)

    return {
        "embedding": jax.random.normal(ks[0], (vocab_size, embed_dim), jnp.float32),
        "w_ih": u(ks[1], (3 * hidden_size, embed_dim)),
        "w_hh": u(ks[2], (3 * hidden_size, hidden_size)),
        "b_ih": u(ks[3], (3 * hidden_size,)),
        "b_hh": u(ks[4], (3 * hidden_size,)),
    }


def pack_params(raw, hidden_size):
    """Transpose + lane-pad GRU weights: each gate gets its own 128-lane block."""
    H = hidden_size
    Hp = _round_up(max(H, LANE), LANE)
    E = raw["w_ih"].shape[1]

    wih_t = jnp.zeros((E, 3 * Hp), jnp.float32)
    whh_t = jnp.zeros((Hp, 3 * Hp), jnp.float32)
    bih = jnp.zeros((1, 3 * Hp), jnp.float32)
    bhh = jnp.zeros((1, 3 * Hp), jnp.float32)
    for g in range(3):  # gate order (r, z, n), same as torch
        wih_t = wih_t.at[:, g * Hp:g * Hp + H].set(raw["w_ih"][g * H:(g + 1) * H, :].T)
        whh_t = whh_t.at[:H, g * Hp:g * Hp + H].set(raw["w_hh"][g * H:(g + 1) * H, :].T)
        bih = bih.at[0, g * Hp:g * Hp + H].set(raw["b_ih"][g * H:(g + 1) * H])
        bhh = bhh.at[0, g * Hp:g * Hp + H].set(raw["b_hh"][g * H:(g + 1) * H])

    return {
        "embedding": raw["embedding"],
        "wih_t": wih_t,
        "whh_t": whh_t,
        "bih": bih,
        "bhh": bhh,
    }


# ------------------------------ Encoder forward ------------------------------


@functools.partial(jax.jit, static_argnames=("hidden_size",))
def encoder_forward(packed, tokens, h0, hidden_size):
    """Mirrors Encoder.forward.

    tokens: (B, S) int32 ids,  h0: (1, B, H) f32
    returns (out (S, B, H), h_n (1, B, H))
    """
    B, S = tokens.shape
    H = hidden_size
    Hp = packed["whh_t"].shape[0]
    Bp = _round_up(max(B, SUBLANE), SUBLANE)

    emb = jnp.take(packed["embedding"], tokens, axis=0)   # (B, S, E)  == nn.Embedding
    x = jnp.transpose(emb, (1, 0, 2))                     # (S, B, E)  == x.permute(1,0,2)
    x = jnp.pad(x, ((0, 0), (0, Bp - B), (0, 0)))         # pad batch to sublane tile

    h0p = jnp.zeros((Bp, Hp), jnp.float32).at[:B, :H].set(h0[0])

    out_p = _gru_scan(x, h0p, packed["wih_t"], packed["whh_t"],
                      packed["bih"], packed["bhh"])       # (S, Bp, Hp)

    out = out_p[:, :B, :H]                                # (S, B, H)
    h_n = out[-1][None]                                   # (1, B, H)
    return out, h_n


# ------------------------------ pure-JAX reference ---------------------------


def encoder_reference(raw, tokens, h0, hidden_size):
    H = hidden_size
    emb = jnp.take(raw["embedding"], tokens, axis=0)
    x = jnp.transpose(emb, (1, 0, 2))                     # (S, B, E)
    w_ih, w_hh = raw["w_ih"], raw["w_hh"]
    b_ih, b_hh = raw["b_ih"], raw["b_hh"]

    def cell(h, xt):
        gi = jnp.dot(xt, w_ih.T, precision=jax.lax.Precision.HIGHEST) + b_ih
        gh = jnp.dot(h, w_hh.T, precision=jax.lax.Precision.HIGHEST) + b_hh
        i_r, i_z, i_n = gi[:, :H], gi[:, H:2 * H], gi[:, 2 * H:]
        h_r, h_z, h_n = gh[:, :H], gh[:, H:2 * H], gh[:, 2 * H:]
        r = jax.nn.sigmoid(i_r + h_r)
        z = jax.nn.sigmoid(i_z + h_z)
        n = jnp.tanh(i_n + r * h_n)
        h_new = (1.0 - z) * n + z * h
        return h_new, h_new

    h_last, outs = jax.lax.scan(cell, h0[0], x)
    return outs, h_last[None]


# ----------------------------------- main ------------------------------------


if __name__ == "__main__":
    VOCAB = 32
    EMBED = 16
    HIDDEN = 32
    BATCH = 2
    SEQ = 8

    root = jax.random.PRNGKey(0)
    k_par, k_tok, k_h0 = jax.random.split(root, 3)

    raw = init_encoder_params(k_par, VOCAB, EMBED, HIDDEN)
    packed = pack_params(raw, HIDDEN)

    tokens = jax.random.randint(k_tok, (BATCH, SEQ), 0, VOCAB, jnp.int32)
    h0 = 0.1 * jax.random.normal(k_h0, (1, BATCH, HIDDEN), jnp.float32)

    out, h_n = encoder_forward(packed, tokens, h0, HIDDEN)
    out, h_n = jax.block_until_ready((out, h_n))

    assert out.shape == (SEQ, BATCH, HIDDEN)
    assert h_n.shape == (1, BATCH, HIDDEN)
    assert out.dtype == jnp.float32

    ref_out, ref_hn = encoder_reference(raw, tokens, h0, HIDDEN)
    assert jnp.allclose(out, ref_out, atol=1e-4, rtol=1e-4), (
        float(jnp.max(jnp.abs(out - ref_out))))
    assert jnp.allclose(h_n, ref_hn, atol=1e-4, rtol=1e-4)

    print("KERNEL_OK")
</pallas_src>

<mosaic_0001>
module attributes {stable_mosaic.version = 11 : i64} {
  func.func @_gru_encoder_kernel(%arg0: i32, %arg1: memref<1x8x16xf32, #tpu.memory_space<vmem>>, %arg2: memref<8x128xf32, #tpu.memory_space<vmem>>, %arg3: memref<16x384xf32, #tpu.memory_space<vmem>>, %arg4: memref<128x384xf32, #tpu.memory_space<vmem>>, %arg5: memref<1x384xf32, #tpu.memory_space<vmem>>, %arg6: memref<1x384xf32, #tpu.memory_space<vmem>>, %arg7: memref<1x8x128xf32, #tpu.memory_space<vmem>>, %arg8: memref<8x128xf32, #tpu.memory_space<vmem>>) attributes {dimension_semantics = [#tpu.dimension_semantics<arbitrary>], iteration_bounds = array<i64: 8>, scalar_prefetch = 0 : i64, scratch_operands = 1 : i64, tpu.core_type = #tpu.core_type<tc>, window_params = [{transform_indices = @transform_0, window_bounds = array<i64: 1, 8, 16>}, {pipeline_mode = #tpu.pipeline_mode<synchronous>, transform_indices = @transform_1, window_bounds = array<i64: 8, 128>}, {pipeline_mode = #tpu.pipeline_mode<synchronous>, transform_indices = @transform_2, window_bounds = array<i64: 16, 384>}, {pipeline_mode = #tpu.pipeline_mode<synchronous>, transform_indices = @transform_3, window_bounds = array<i64: 128, 384>}, {pipeline_mode = #tpu.pipeline_mode<synchronous>, transform_indices = @transform_4, window_bounds = array<i64: 1, 384>}, {pipeline_mode = #tpu.pipeline_mode<synchronous>, transform_indices = @transform_5, window_bounds = array<i64: 1, 384>}, {transform_indices = @transform_6, window_bounds = array<i64: 1, 8, 128>}]} {
    %c0_i32 = arith.constant 0 : i32
    %0 = arith.cmpi eq, %arg0, %c0_i32 : i32
    %1 = arith.extui %0 : i1 to i32
    %c0_i32_0 = arith.constant 0 : i32
    %2 = arith.cmpi ne, %1, %c0_i32_0 : i32
    scf.if %2 {
      %c0_22 = arith.constant 0 : index
      %c0_23 = arith.constant 0 : index
      %46 = vector.load %arg2[%c0_22, %c0_23] : memref<8x128xf32, #tpu.memory_space<vmem>>, vector<8x128xf32>
      %c0_24 = arith.constant 0 : index
      %c0_25 = arith.constant 0 : index
      %47 = vector.load %arg8[%c0_24, %c0_25] : memref<8x128xf32, #tpu.memory_space<vmem>>, vector<8x128xf32>
      tpu.vector_store %arg8[%c0_24, %c0_25], %46 {strides = array<i32>} : memref<8x128xf32, #tpu.memory_space<vmem>>, vector<8x128xf32>,
    } else {
    }
    %c0 = arith.constant 0 : index
    %c0_1 = arith.constant 0 : index
    %c0_2 = arith.constant 0 : index
    %3 = vector.load %arg1[%c0, %c0_1, %c0_2] : memref<1x8x16xf32, #tpu.memory_space<vmem>>, vector<1x8x16xf32>
    %4 = vector.shape_cast %3 : vector<1x8x16xf32> to vector<8x16xf32>
    %c0_3 = arith.constant 0 : index
    %c0_4 = arith.constant 0 : index
    %5 = vector.load %arg8[%c0_3, %c0_4] : memref<8x128xf32, #tpu.memory_space<vmem>>, vector<8x128xf32>
    %c0_5 = arith.constant 0 : index
    %c0_6 = arith.constant 0 : index
    %6 = vector.load %arg3[%c0_5, %c0_6] : memref<16x384xf32, #tpu.memory_space<vmem>>, vector<16x384xf32>
    %cst = arith.constant dense<0.000000e+00> : vector<8x384xf32>
    %7 = tpu.matmul %4, %6, %cst {dimension_numbers = #tpu.dot_dimension_numbers<[1], [0], [0], [1], [0, 0, 1, 1], [], []>} : vector<8x16xf32>, vector<16x384xf32>, vector<8x384xf32> -> vector<8x384xf32>
    %c0_7 = arith.constant 0 : index
    %c0_8 = arith.constant 0 : index
    %8 = vector.load %arg5[%c0_7, %c0_8] : memref<1x384xf32, #tpu.memory_space<vmem>>, vector<1x384xf32>
    %9 = vector.broadcast %8 : vector<1x384xf32> to vector<8x384xf32>
    %10 = arith.addf %7, %9 : vector<8x384xf32>
    %c0_9 = arith.constant 0 : index
    %c0_10 = arith.constant 0 : index
    %11 = vector.load %arg4[%c0_9, %c0_10] : memref<128x384xf32, #tpu.memory_space<vmem>>, vector<128x384xf32>
    %cst_11 = arith.constant dense<0.000000e+00> : vector<8x384xf32>
    %12 = tpu.matmul %5, %11, %cst_11 {dimension_numbers = #tpu.dot_dimension_numbers<[1], [0], [0], [1], [0, 0, 1, 1], [], []>} : vector<8x128xf32>, vector<128x384xf32>, vector<8x384xf32> -> vector<8x384xf32>
    %c0_12 = arith.constant 0 : index
    %c0_13 = arith.constant 0 : index
    %13 = vector.load %arg6[%c0_12, %c0_13] : memref<1x384xf32, #tpu.memory_space<vmem>>, vector<1x384xf32>
    %14 = vector.broadcast %13 : vector<1x384xf32> to vector<8x384xf32>
    %15 = arith.addf %12, %14 : vector<8x384xf32>
    %16 = vector.extract_strided_slice %10 {offsets = [0, 0], sizes = [8, 128], strides = [1, 1]} : vector<8x384xf32> to vector<8x128xf32>
    %17 = vector.extract_strided_slice %10 {offsets = [0, 128], sizes = [8, 128], strides = [1, 1]} : vector<8x384xf32> to vector<8x128xf32>
    %18 = vector.extract_strided_slice %10 {offsets = [0, 256], sizes = [8, 128], strides = [1, 1]} : vector<8x384xf32> to vector<8x128xf32>
    %19 = vector.extract_strided_slice %15 {offsets = [0, 0], sizes = [8, 128], strides = [1, 1]} : vector<8x384xf32> to vector<8x128xf32>
    %20 = vector.extract_strided_slice %15 {offsets = [0, 128], sizes = [8, 128], strides = [1, 1]} : vector<8x384xf32> to vector<8x128xf32>
    %21 = vector.extract_strided_slice %15 {offsets = [0, 256], sizes = [8, 128], strides = [1, 1]} : vector<8x384xf32> to vector<8x128xf32>
    %22 = arith.addf %16, %19 : vector<8x128xf32>
    %23 = arith.negf %22 : vector<8x128xf32>
    %24 = math.exp %23 : vector<8x128xf32>
    %cst_14 = arith.constant 1.000000e+00 : f32
    %25 = vector.broadcast %cst_14 : f32 to vector<8x128xf32>
    %26 = arith.addf %25, %24 : vector<8x128xf32>
    %27 = arith.divf %25, %26 : vector<8x128xf32>
    %28 = arith.addf %17, %20 : vector<8x128xf32>
    %29 = arith.negf %28 : vector<8x128xf32>
    %30 = math.exp %29 : vector<8x128xf32>
    %cst_15 = arith.constant 1.000000e+00 : f32
    %31 = vector.broadcast %cst_15 : f32 to vector<8x128xf32>
    %32 = arith.addf %31, %30 : vector<8x128xf32>
    %33 = arith.divf %31, %32 : vector<8x128xf32>
    %34 = arith.mulf %27, %21 : vector<8x128xf32>
    %35 = arith.addf %18, %34 : vector<8x128xf32>
    %36 = math.tanh %35 : vector<8x128xf32>
    %cst_16 = arith.constant 1.000000e+00 : f32
    %37 = vector.broadcast %cst_16 : f32 to vector<8x128xf32>
    %38 = arith.subf %37, %33 : vector<8x128xf32>
    %39 = arith.mulf %38, %36 : vector<8x128xf32>
    %40 = arith.mulf %33, %5 : vector<8x128xf32>
    %41 = arith.addf %39, %40 : vector<8x128xf32>
    %c0_17 = arith.constant 0 : index
    %c0_18 = arith.constant 0 : index
    %42 = vector.load %arg8[%c0_17, %c0_18] : memref<8x128xf32, #tpu.memory_space<vmem>>, vector<8x128xf32>
    tpu.vector_store %arg8[%c0_17, %c0_18], %41 {strides = array<i32>} : memref<8x128xf32, #tpu.memory_space<vmem>>, vector<8x128xf32>,
    %c0_19 = arith.constant 0 : index
    %c0_20 = arith.constant 0 : index
    %c0_21 = arith.constant 0 : index
    %43 = vector.load %arg7[%c0_19, %c0_20, %c0_21] : memref<1x8x128xf32, #tpu.memory_space<vmem>>, vector<1x8x128xf32>
    %44 = vector.shape_cast %43 : vector<1x8x128xf32> to vector<8x128xf32>
    %45 = vector.shape_cast %41 : vector<8x128xf32> to vector<1x8x128xf32>
    tpu.vector_store %arg7[%c0_19, %c0_20, %c0_21], %45 {strides = array<i32>} : memref<1x8x128xf32, #tpu.memory_space<vmem>>, vector<1x8x128xf32>,
    return
  }
  func.func @transform_0(%arg0: i32) -> (i32, i32, i32) {
    %c0_i32 = arith.constant 0 : i32
    %c0_i32_0 = arith.constant 0 : i32
    %c0_i32_1 = arith.constant 0 : i32
    return %arg0, %c0_i32, %c0_i32_0 : i32, i32, i32
  }
  func.func @transform_1(%arg0: i32) -> (i32, i32) {
    %c0_i32 = arith.constant 0 : i32
    %c0_i32_0 = arith.constant 0 : i32
    %c0_i32_1 = arith.constant 0 : i32
    return %c0_i32, %c0_i32_0 : i32, i32
  }
  func.func @transform_2(%arg0: i32) -> (i32, i32) {
    %c0_i32 = arith.constant 0 : i32
    %c0_i32_0 = arith.constant 0 : i32
    %c0_i32_1 = arith.constant 0 : i32
    return %c0_i32, %c0_i32_0 : i32, i32
  }
  func.func @transform_3(%arg0: i32) -> (i32, i32) {
    %c0_i32 = arith.constant 0 : i32
    %c0_i32_0 = arith.constant 0 : i32
    %c0_i32_1 = arith.constant 0 : i32
    return %c0_i32, %c0_i32_0 : i32, i32
  }
  func.func @transform_4(%arg0: i32) -> (i32, i32) {
    %c0_i32 = arith.constant 0 : i32
    %c0_i32_0 = arith.constant 0 : i32
    %c0_i32_1 = arith.constant 0 : i32
    return %c0_i32, %c0_i32_0 : i32, i32
  }
  func.func @transform_5(%arg0: i32) -> (i32, i32) {
    %c0_i32 = arith.constant 0 : i32
    %c0_i32_0 = arith.constant 0 : i32
    %c0_i32_1 = arith.constant 0 : i32
    return %c0_i32, %c0_i32_0 : i32, i32
  }
  func.func @transform_6(%arg0: i32) -> (i32, i32, i32) {
    %c0_i32 = arith.constant 0 : i32
    %c0_i32_0 = arith.constant 0 : i32
    %c0_i32_1 = arith.constant 0 : i32
    return %arg0, %c0_i32, %c0_i32_0 : i32, i32, i32
  }
}

</mosaic_0001>

<llo_original>
// kernel: encoder_forward.1
$region0: #{encoder_forward.1}
  #allocation0 [shape = 'u32[]', space=smem, size = 0x4, offset = 0x4, fixed_abs, tag = 'smem constant byte address 0x4 - core index']
  #allocation1 [shape = 'u32[144,128]{1,0:T(1,128)}', space=vmem, size = 0x12000, scoped, tag = 'internal scratch']
  #allocation2 [shape = 'f32[8,128]{1,0:T(8,128)}', space=vmem, size = 0x1000, scoped, tag = 'scratch operand']
  %s0 = inlined_call_operand.vmem [shape: f32[8,8,16], index: 0, kind: input, shape index: {}]
  %s1 = inlined_call_operand.vmem [shape: f32[8,128], index: 1, kind: input, shape index: {}]
  %s2 = inlined_call_operand.vmem [shape: f32[16,384], index: 2, kind: input, shape index: {}]
  %s3 = inlined_call_operand.hbm [shape: f32[128,384], index: 3, kind: input, shape index: {}]
  %s4 = inlined_call_operand.vmem [shape: f32[1,384], index: 4, kind: input, shape index: {}]
  %s5 = inlined_call_operand.vmem [shape: f32[1,384], index: 5, kind: input, shape index: {}]
  %s6 = inlined_call_operand.vmem [shape: f32[8,8,128], index: 6, kind: output, shape index: {}]
  %s7 = sld [smem:[#allocation0]]
  $region65: #{encoder_forward.1} parent=0
    _
  %s9 = ssub.s32 1, %s7
  %s10 = scalar_select 0, %s9, %s7
  $region1: #{encoder_forward.1} parent=0
    #allocation3 [shape = 'u8[196608]{0}', space=vmem, size = 0x30000, scoped, tag = 'input window, operand 3, single buffered']
    #allocation4 [shape = 's32[2]{0}', space=sflag, size = 0x8, scoped, tag = 'scoped memory for encoder_forward.1']
    %11 = vsyncpa [#allocation4], 0
    loop: start=0, step=1, limit=10
    $region2: #{encoder_forward.1} parent=1 // loop_pre_header
      _
    $region3: #{encoder_forward.1} parent=1 // loop_header
      %s13 = sphi 0, %s17
      %p14 = scmp.ge.s32.totalorder %s13, 10
      %s23 = sphi 0, %s25
      %s26 = sphi 0, %s23
      %s27 = sphi 0, %s26
      %s43 = sphi 0, %s27
      %s47 = sphi 0, %s47
      %s49 = sphi 0, %s47
      %s50 = sphi 0, %s49
      %s64 = sphi 0, %s50
      %s68 = sphi 0, %s68
      %s70 = sphi 0, %s68
      %s71 = sphi 0, %s70
      %s85 = sphi 0, %s71
      %s89 = sphi 0, %s89
      %s91 = sphi 0, %s89
      %s92 = sphi 0, %s91
      %s106 = sphi 0, %s92
      %s110 = sphi 0, %s110
      %s112 = sphi 0, %s110
      %s113 = sphi 0, %s112
      %s127 = sphi 0, %s113
      %s131 = sphi 0, %s131
      %s133 = sphi 0, %s131
      %s134 = sphi 0, %s133
      %s148 = sphi 0, %s134
      %s154 = sphi 0, %s156
      %s157 = sphi 0, %s154
      %s158 = sphi 0, %s157
      %s174 = sphi 0, %s158
    $region4: #{encoder_forward.1} parent=1 // loop_header_branch
      %16 = sbr.rel (%p14) target = $region8
    $region5: #{encoder_forward.1} parent=1 // loop_body
      %s18 = ssub.s32 %s13, 1
      %s19 = ssub.s32 %s13, 2
      %s20 = sadd.s32 %s13, 1
      %s21 = ssub.s32 %s13, %s20
      %p22 = scmp.eq.s32.totalorder %s21, 0
      %s24 = sadd.s32 %s23, 1
      %s25 = scalar_select %p22, %s23, %s24
      %p28 = pneg %p22
      %p29 = scmp.eq.s32.totalorder %s13, 7
      %p30 = por %p28, %p29
      %p31 = scmp.ne.s32.totalorder %s23, %s26
      %p32 = scmp.eq.s32.totalorder %s13, 0
      %p33 = por %p31, %p32
      %p34 = scmp.ne.s32.totalorder %s23, %s26
      %p35 = scmp.eq.s32.totalorder %s18, 7
      %p36 = por %p34, %p35
      %p37 = scmp.ne.s32.totalorder %s26, %s27
      %p38 = scmp.eq.s32.totalorder %s18, 0
      %p39 = por %p37, %p38
      %p40 = scmp.ne.s32.totalorder %s26, %s27
      %p41 = scmp.eq.s32.totalorder %s19, 7
      %p42 = por %p40, %p41
      %p44 = scmp.ne.s32.totalorder %s27, %s43
      %p45 = scmp.eq.s32.totalorder %s19, 0
      %p46 = por %p44, %p45
      %s48 = sadd.s32 %s47, 1
      %p51 = scmp.eq.s32.totalorder %s13, 7
      %p52 = scmp.ne.s32.totalorder %s47, %s49
      %p53 = scmp.eq.s32.totalorder %s13, 0
      %p54 = por %p52, %p53
      %p55 = scmp.ne.s32.totalorder %s47, %s49
      %p56 = scmp.eq.s32.totalorder %s18, 7
      %p57 = por %p55, %p56
      %p58 = scmp.ne.s32.totalorder %s49, %s50
      %p59 = scmp.eq.s32.totalorder %s18, 0
      %p60 = por %p58, %p59
      %p61 = scmp.ne.s32.totalorder %s49, %s50
      %p62 = scmp.eq.s32.totalorder %s19, 7
      %p63 = por %p61, %p62
      %p65 = scmp.ne.s32.totalorder %s50, %s64
      %p66 = scmp.eq.s32.totalorder %s19, 0
      %p67 = por %p65, %p66
      %s69 = sadd.s32 %s68, 1
      %p72 = scmp.eq.s32.totalorder %s13, 7
      %p73 = scmp.ne.s32.totalorder %s68, %s70
      %p74 = scmp.eq.s32.totalorder %s13, 0
      %p75 = por %p73, %p74
      %p76 = scmp.ne.s32.totalorder %s68, %s70
      %p77 = scmp.eq.s32.totalorder %s18, 7
      %p78 = por %p76, %p77
      %p79 = scmp.ne.s32.totalorder %s70, %s71
      %p80 = scmp.eq.s32.totalorder %s18, 0
      %p81 = por %p79, %p80
      %p82 = scmp.ne.s32.totalorder %s70, %s71
      %p83 = scmp.eq.s32.totalorder %s19, 7
      %p84 = por %p82, %p83
      %p86 = scmp.ne.s32.totalorder %s71, %s85
      %p87 = scmp.eq.s32.totalorder %s19, 0
      %p88 = por %p86, %p87
      %s90 = sadd.s32 %s89, 1
      %p93 = scmp.eq.s32.totalorder %s13, 7
      %p94 = scmp.ne.s32.totalorder %s89, %s91
      %p95 = scmp.eq.s32.totalorder %s13, 0
      %p96 = por %p94, %p95
      %p97 = scmp.ne.s32.totalorder %s89, %s91
      %p98 = scmp.eq.s32.totalorder %s18, 7
      %p99 = por %p97, %p98
      %p100 = scmp.ne.s32.totalorder %s91, %s92
      %p101 = scmp.eq.s32.totalorder %s18, 0
      %p102 = por %p100, %p101
      %p103 = scmp.ne.s32.totalorder %s91, %s92
      %p104 = scmp.eq.s32.totalorder %s19, 7
      %p105 = por %p103, %p104
      %p107 = scmp.ne.s32.totalorder %s92, %s106
      %p108 = scmp.eq.s32.totalorder %s19, 0
      %p109 = por %p107, %p108
      %s111 = sadd.s32 %s110, 1
      %p114 = scmp.eq.s32.totalorder %s13, 7
      %p115 = scmp.ne.s32.totalorder %s110, %s112
      %p116 = scmp.eq.s32.totalorder %s13, 0
      %p117 = por %p115, %p116
      %p118 = scmp.ne.s32.totalorder %s110, %s112
      %p119 = scmp.eq.s32.totalorder %s18, 7
      %p120 = por %p118, %p119
      %p121 = scmp.ne.s32.totalorder %s112, %s113
      %p122 = scmp.eq.s32.totalorder %s18, 0
      %p123 = por %p121, %p122
      %p124 = scmp.ne.s32.totalorder %s112, %s113
      %p125 = scmp.eq.s32.totalorder %s19, 7
      %p126 = por %p124, %p125
      %p128 = scmp.ne.s32.totalorder %s113, %s127
      %p129 = scmp.eq.s32.totalorder %s19, 0
      %p130 = por %p128, %p129
      %s132 = sadd.s32 %s131, 1
      %p135 = scmp.eq.s32.totalorder %s13, 7
      %p136 = scmp.ne.s32.totalorder %s131, %s133
      %p137 = scmp.eq.s32.totalorder %s13, 0
      %p138 = por %p136, %p137
      %p139 = scmp.ne.s32.totalorder %s131, %s133
      %p140 = scmp.eq.s32.totalorder %s18, 7
      %p141 = por %p139, %p140
      %p142 = scmp.ne.s32.totalorder %s133, %s134
      %p143 = scmp.eq.s32.totalorder %s18, 0
      %p144 = por %p142, %p143
      %p145 = scmp.ne.s32.totalorder %s133, %s134
      %p146 = scmp.eq.s32.totalorder %s19, 7
      %p147 = por %p145, %p146
      %p149 = scmp.ne.s32.totalorder %s134, %s148
      %p150 = scmp.eq.s32.totalorder %s19, 0
      %p151 = por %p149, %p150
      %s152 = ssub.s32 %s13, %s20
      %p153 = scmp.eq.s32.totalorder %s152, 0
      %s155 = sadd.s32 %s154, 1
      %s156 = scalar_select %p153, %s154, %s155
      %p159 = pneg %p153
      %p160 = scmp.eq.s32.totalorder %s13, 7
      %p161 = por %p159, %p160
      %p162 = scmp.ne.s32.totalorder %s154, %s157
      %p163 = scmp.eq.s32.totalorder %s13, 0
      %p164 = por %p162, %p163
      %p165 = scmp.ne.s32.totalorder %s154, %s157
      %p166 = scmp.eq.s32.totalorder %s18, 7
      %p167 = por %p165, %p166
      %p168 = scmp.ne.s32.totalorder %s157, %s158
      %p169 = scmp.eq.s32.totalorder %s18, 0
      %p170 = por %p168, %p169
      %p171 = scmp.ne.s32.totalorder %s157, %s158
      %p172 = scmp.eq.s32.totalorder %s19, 7
      %p173 = por %p171, %p172
      %p175 = scmp.ne.s32.totalorder %s158, %s174
      %p176 = scmp.eq.s32.totalorder %s19, 0
      %p177 = por %p175, %p176
      %p178 = scmp.le.s32.totalorder 1, %s13
      %p179 = scmp.lt.s32.totalorder %s13, 9
      %p180 = pnand %p178, %p179
      %p181 = pneg %p180
      // Predicated region
      $region9: #{encoder_forward.1} parent=5 // pred_check
        _
      $region10: #{encoder_forward.1} parent=5 // pred_check_branch
        %183 = sbr.rel (%p180) target = $region12
      $region11: #{encoder_forward.1} parent=5 // pred_region
        %s184 = ssub.s32 %s13, 1
        // Predicated region
        $region13: #{encoder_forward.1} parent=11 // pred_check
          %p185 = pneg %p60
        $region14: #{encoder_forward.1} parent=11 // pred_check_branch
          %187 = sbr.rel (%p185) target = $region16
        $region15: #{encoder_forward.1} parent=11 // pred_region
          _
        $region16: #{encoder_forward.1} parent=11 // pred_fallthru
          _
        // Predicated region
        $region17: #{encoder_forward.1} parent=11 // pred_check
          %p188 = pneg %p81
        $region18: #{encoder_forward.1} parent=11 // pred_check_branch
          %190 = sbr.rel (%p188) target = $region20
        $region19: #{encoder_forward.1} parent=11 // pred_region
          _
        $region20: #{encoder_forward.1} parent=11 // pred_fallthru
          _
        // Predicated region
        $region21: #{encoder_forward.1} parent=11 // pred_check
          %p191 = pneg %p102
        $region22: #{encoder_forward.1} parent=11 // pred_check_branch
          %193 = sbr.rel (%p191) target = $region24
        $region23: #{encoder_forward.1} parent=11 // pred_region
          %s195 = ssub.s32 6144, 6144
          %196 = vsyncadd [#allocation4], %s195
          %s197 = sshll.u32 [#allocation3], 4
          %s198 = int_to_ptr.vmem [resolvable:$true] %s197
          %203 = dma.hbm_to_vmem [thread:$0]  %s3, 6144, %s198, [#allocation4], 384, 384, 24
        $region24: #{encoder_forward.1} parent=11 // pred_fallthru
          _
        // Predicated region
        $region25: #{encoder_forward.1} parent=11 // pred_check
          %p204 = pneg %p123
        $region26: #{encoder_forward.1} parent=11 // pred_check_branch
          %206 = sbr.rel (%p204) target = $region28
        $region27: #{encoder_forward.1} parent=11 // pred_region
          _
        $region28: #{encoder_forward.1} parent=11 // pred_fallthru
          _
        // Predicated region
        $region29: #{encoder_forward.1} parent=11 // pred_check
          %p207 = pneg %p144
        $region30: #{encoder_forward.1} parent=11 // pred_check_branch
          %209 = sbr.rel (%p207) target = $region32
        $region31: #{encoder_forward.1} parent=11 // pred_region
          _
        $region32: #{encoder_forward.1} parent=11 // pred_fallthru
          _
      $region12: #{encoder_forward.1} parent=5 // pred_fallthru
        _
      %p210 = scmp.lt.s32.totalorder %s13, 8
      // Predicated region
      $region33: #{encoder_forward.1} parent=5 // pred_check
        %p211 = pneg %p210
      $region34: #{encoder_forward.1} parent=5 // pred_check_branch
        %213 = sbr.rel (%p211) target = $region36
      $region35: #{encoder_forward.1} parent=5 // pred_region
        // Predicated region
        $region37: #{encoder_forward.1} parent=35 // pred_check
          %p214 = pneg %p33
        $region38: #{encoder_forward.1} parent=35 // pred_check_branch
          %216 = sbr.rel (%p214) target = $region40
        $region39: #{encoder_forward.1} parent=35 // pred_region
          %p217 = scmp.lt.s32.totalorder %s13, 7
          %s218 = scalar_select %p217, %s13, 7
          %s219 = smul.addr %s218, 8
          %s220 = scalar_lea.vmem %s0, %s219
        $region40: #{encoder_forward.1} parent=35 // pred_fallthru
          _
      $region36: #{encoder_forward.1} parent=5 // pred_fallthru
        _
      %p221 = scmp.le.s32.totalorder 1, %s13
      %p222 = scmp.lt.s32.totalorder %s13, 9
      %p223 = pnand %p221, %p222
      %p224 = pneg %p223
      // Predicated region
      $region41: #{encoder_forward.1} parent=5 // pred_check
        _
      $region42: #{encoder_forward.1} parent=5 // pred_check_branch
        %226 = sbr.rel (%p223) target = $region44
      $region43: #{encoder_forward.1} parent=5 // pred_region
        %s227 = ssub.s32 %s13, 1
        // Predicated region
        $region45: #{encoder_forward.1} parent=43 // pred_check
          %p228 = pneg %p102
        $region46: #{encoder_forward.1} parent=43 // pred_check_branch
          %230 = sbr.rel (%p228) target = $region48
        $region47: #{encoder_forward.1} parent=43 // pred_region
          %231 = dma.done [#allocation4], 6144
        $region48: #{encoder_forward.1} parent=43 // pred_fallthru
          _
        %p232 = scmp.lt.s32.totalorder %s18, 7
        %s233 = scalar_select %p232, %s18, 7
        %s234 = smul.addr %s233, 8
        %s235 = scalar_lea.vmem %s0, %s234
        %p236 = pneg %p39
        %p237 = pneg %p36
        %p238 = pneg %p60
        %p239 = pneg %p57
        %p240 = pneg %p81
        %p241 = pneg %p78
        %p242 = pneg %p102
        %p243 = pneg %p99
        %p244 = pneg %p123
        %p245 = pneg %p120
        %p246 = pneg %p144
        %p247 = pneg %p141
        %p248 = pneg %p170
        %p249 = pneg %p167
        %p250 = scmp.lt.s32.totalorder %s18, 7
        %s251 = scalar_select %p250, %s18, 7
        %s252 = smul.addr %s251, 8
        %s253 = scalar_lea.vmem %s6, %s252
        %p254 = scmp.lt.s32.totalorder %s18, 7
        %s255 = scalar_select %p254, %s18, 7
        %s256 = smul.addr %s255, 8
        %s257 = scalar_lea.vmem %s0, %s256
        %p258 = scmp.lt.s32.totalorder %s18, 7
        %s259 = scalar_select %p258, %s18, 7
        %s260 = smul.addr %s259, 8
        %s261 = scalar_lea.vmem %s6, %s260
        %p262 = scmp.eq.s32.totalorder %s18, 0
        // Predicated region
        $region49: #{encoder_forward.1} parent=43 // pred_check
          %p263 = pneg %p262
        $region50: #{encoder_forward.1} parent=43 // pred_check_branch
          %265 = sbr.rel (%p263) target = $region52
        $region51: #{encoder_forward.1} parent=43 // pred_region
          %v266 = vld [vmem:[%s1] sm:$0xff]
          %267 = vst [vmem:[#allocation2] sm:$0xff] %v266
        $region52: #{encoder_forward.1} parent=43 // pred_fallthru
          _
        %v268 = vld [vmem:[%s257] sm:$0xff]
        %v269 = vld [vmem:[#allocation2] sm:$0xff]
        %v270 = vld [vmem:[%s2] sm:$0xff]
        %v271 = vld [vmem:[%s2 + $0x8] sm:$0xff]
        %v272 = vld [vmem:[%s2 + $0x10] sm:$0xff]
        %v273 = vld [vmem:[%s2 + $0x18] sm:$0xff]
        %v274 = vld [vmem:[%s2 + $0x20] sm:$0xff]
        %v275 = vld [vmem:[%s2 + $0x28] sm:$0xff]
        %v276 = vld [vmem:[%s4] sm:$0x7]
        %v278 = vlaneseq
        %v279 = vshrl.u32 %v278, 7
        %v280 = vsub.s32 0, %v279
        %v281 = vrot.slane %v276, %v280
        %v282 = vlaneseq
        %v283 = vshrl.u32 %v282, 7
        %v284 = vsub.s32 1, %v283
        %v285 = vrot.slane %v276, %v284
        %v286 = vlaneseq
        %v287 = vshrl.u32 %v286, 7
        %v288 = vsub.s32 2, %v287
        %v289 = vrot.slane %v276, %v288
        %vm293 = vcmask 130048
        %v295 = vsel %vm293, %v268, 0
        %297 = vmatprep.subr.mxu0 %v271
        %298 = vmatpush1.msra.mxu0 %v270
        %299 = vmatprep.subr.mxu0 %v274
        %300 = vmatpush1.msra.mxu0 %v273
        %301 = vmatprep.subr.mxu0 0.0
        %302 = vmatpush1.msra.mxu0 0.0
        %303 = vmatprep.subr.mxu0 0.0
        %304 = vmatpush1.msra.mxu0 0.0
        %305 = vmatprep.subr.mxu0 0.0
        %306 = vmatpush1.msra.mxu0 0.0
        %307 = vmatprep.subr.mxu0 0.0
        %308 = vmatpush1.msra.mxu0 0.0
        %309 = vmatprep.subr.mxu0 0.0
        %310 = vmatpush1.msra.mxu0 0.0
        %311 = vmatprep.subr.mxu0 0.0
        %312 = vmatpush1.msra.mxu0 0.0
        %313 = vmatprep.subr.mxu0 0.0
        %314 = vmatpush1.msra.mxu0 0.0
        %315 = vmatprep.subr.mxu0 0.0
        %316 = vmatpush1.msra.mxu0 0.0
        %317 = vmatprep.subr.mxu0 0.0
        %318 = vmatpush1.msra.mxu0 0.0
        %319 = vmatprep.subr.mxu0 0.0
        %320 = vmatpush1.msra.mxu0 0.0
        %321 = vmatprep.subr.mxu0 0.0
        %322 = vmatpush1.msra.mxu0 0.0
        %323 = vmatprep.subr.mxu0 0.0
        %324 = vmatpush1.msra.mxu0 0.0
        %325 = vmatprep.subr.mxu0 0.0
        %326 = vmatpush1.msra.mxu0 0.0
        %327 = vmatprep.subr.mxu0 0.0
        %328 = vmatpush1.msra.mxu0 0.0
        %329 = vmatprep.subr.mxu0 0.0
        %330 = vmatpush1.msra.mxu0 0.0
        %331 = vmatprep.subr.mxu0 0.0
        %332 = vmatpush1.msra.mxu0 0.0
        %333 = vmatprep.subr.mxu0 0.0
        %334 = vmatpush1.msra.mxu0 0.0
        %335 = vmatprep.subr.mxu0 0.0
        %336 = vmatpush1.msra.mxu0 0.0
        %337 = vmatprep.subr.mxu0 0.0
        %338 = vmatpush1.msra.mxu0 0.0
        %339 = vmatprep.subr.mxu0 0.0
        %340 = vmatpush1.msra.mxu0 0.0
        %341 = vmatprep.subr.mxu0 0.0
        %342 = vmatpush1.msra.mxu0 0.0
        %343 = vmatprep.subr.mxu0 0.0
        %344 = vmatpush1.msra.mxu0 0.0
        %345 = vmatprep.subr.mxu0 0.0
        %346 = vmatpush1.msra.mxu0 0.0
        %347 = vmatprep.subr.mxu0 0.0
        %348 = vmatpush1.msra.mxu0 0.0
        %349 = vmatprep.subr.mxu0 0.0
        %350 = vmatpush1.msra.mxu0 0.0
        %351 = vmatprep.subr.mxu0 0.0
        %352 = vmatpush1.msra.mxu0 0.0
        %353 = vmatprep.subr.mxu0 0.0
        %354 = vmatpush1.msra.mxu0 0.0
        %355 = vmatprep.subr.mxu0 0.0
        %356 = vmatpush1.msra.mxu0 0.0
        %357 = vmatprep.subr.mxu0 0.0
        %358 = vmatpush1.msra.mxu0 0.0
        %359 = vmatprep.subr.mxu0 0.0
        %360 = vmatpush1.msra.mxu0 0.0
        %361 = vmatprep.mubr.f32.mxu0 0.0
        %362 = vmatmul.mubr.f32.gmra.mrb[0].mxu0 %v295
        %v363 = vpop.f32.mrb[0].mxu0
        %v364 = vadd.f32 %v281, %v363
        %v365 = vpop.f32.mrb[0].mxu0
        %v366 = vadd.f32 %v285, %v365
        %367 = vdwg.mxu0
        %368 = vmatprep.subr.mxu0 0.0
        %369 = vmatpush1.msra.mxu0 %v272
        %370 = vmatprep.subr.mxu0 0.0
        %371 = vmatpush1.msra.mxu0 %v275
        %372 = vmatprep.subr.mxu0 0.0
        %373 = vmatpush1.msra.mxu0 0.0
        %374 = vmatprep.subr.mxu0 0.0
        %375 = vmatpush1.msra.mxu0 0.0
        %376 = vmatprep.subr.mxu0 0.0
        %377 = vmatpush1.msra.mxu0 0.0
        %378 = vmatprep.subr.mxu0 0.0
        %379 = vmatpush1.msra.mxu0 0.0
        %380 = vmatprep.subr.mxu0 0.0
        %381 = vmatpush1.msra.mxu0 0.0
        %382 = vmatprep.subr.mxu0 0.0
        %383 = vmatpush1.msra.mxu0 0.0
        %384 = vmatprep.subr.mxu0 0.0
        %385 = vmatpush1.msra.mxu0 0.0
        %386 = vmatprep.subr.mxu0 0.0
        %387 = vmatpush1.msra.mxu0 0.0
        %388 = vmatprep.subr.mxu0 0.0
        %389 = vmatpush1.msra.mxu0 0.0
        %390 = vmatprep.subr.mxu0 0.0
        %391 = vmatpush1.msra.mxu0 0.0
        %392 = vmatprep.subr.mxu0 0.0
        %393 = vmatpush1.msra.mxu0 0.0
        %394 = vmatprep.subr.mxu0 0.0
        %395 = vmatpush1.msra.mxu0 0.0
        %396 = vmatprep.subr.mxu0 0.0
        %397 = vmatpush1.msra.mxu0 0.0
        %398 = vmatprep.subr.mxu0 0.0
        %399 = vmatpush1.msra.mxu0 0.0
        %400 = vmatprep.subr.mxu0 0.0
        %401 = vmatpush1.msra.mxu0 0.0
        %402 = vmatprep.subr.mxu0 0.0
        %403 = vmatpush1.msra.mxu0 0.0
        %404 = vmatprep.subr.mxu0 0.0
        %405 = vmatpush1.msra.mxu0 0.0
        %406 = vmatprep.subr.mxu0 0.0
        %407 = vmatpush1.msra.mxu0 0.0
        %408 = vmatprep.subr.mxu0 0.0
        %409 = vmatpush1.msra.mxu0 0.0
        %410 = vmatprep.subr.mxu0 0.0
        %411 = vmatpush1.msra.mxu0 0.0
        %412 = vmatprep.subr.mxu0 0.0
        %413 = vmatpush1.msra.mxu0 0.0
        %414 = vmatprep.subr.mxu0 0.0
        %415 = vmatpush1.msra.mxu0 0.0
        %416 = vmatprep.subr.mxu0 0.0
        %417 = vmatpush1.msra.mxu0 0.0
        %418 = vmatprep.subr.mxu0 0.0
        %419 = vmatpush1.msra.mxu0 0.0
        %420 = vmatprep.subr.mxu0 0.0
        %421 = vmatpush1.msra.mxu0 0.0
        %422 = vmatprep.subr.mxu0 0.0
        %423 = vmatpush1.msra.mxu0 0.0
        %424 = vmatprep.subr.mxu0 0.0
        %425 = vmatpush1.msra.mxu0 0.0
        %426 = vmatprep.subr.mxu0 0.0
        %427 = vmatpush1.msra.mxu0 0.0
        %428 = vmatprep.subr.mxu0 0.0
        %429 = vmatpush1.msra.mxu0 0.0
        %430 = vmatprep.subr.mxu0 0.0
        %431 = vmatpush1.msra.mxu0 0.0
        %432 = vmatprep.mubr.f32.mxu0 0.0
        %433 = vmatmul.mubr.f32.gmra.mrb[0].mxu0 %v295
        %v434 = vpop.f32.mrb[0].mxu0
        %v435 = vadd.f32 %v289, %v434
        %v436 = vpop.f32.mrb[0].mxu0
        %437 = vdwg.mxu0
        %v438 = vld [vmem:[#allocation3] sm:$0xff]
        %v439 = vld [vmem:[#allocation3 + $0x8] sm:$0xff]
        %v440 = vld [vmem:[#allocation3 + $0x10] sm:$0xff]
        %v441 = vld [vmem:[#allocation3 + $0x18] sm:$0xff]
        %v442 = vld [vmem:[#allocation3 + $0x20] sm:$0xff]
        %v443 = vld [vmem:[#allocation3 + $0x28] sm:$0xff]
        %v444 = vld [vmem:[#allocation3 + $0x30] sm:$0xff]
        %v445 = vld [vmem:[#allocation3 + $0x38] sm:$0xff]
        %v446 = vld [vmem:[#allocation3 + $0x40] sm:$0xff]
        %v447 = vld [vmem:[#allocation3 + $0x48] sm:$0xff]
        %v448 = vld [vmem:[#allocation3 + $0x50] sm:$0xff]
        %v449 = vld [vmem:[#allocation3 + $0x58] sm:$0xff]
        %v450 = vld [vmem:[#allocation3 + $0x60] sm:$0xff]
        %v451 = vld [vmem:[#allocation3 + $0x68] sm:$0xff]
        %v452 = vld [vmem:[#allocation3 + $0x70] sm:$0xff]
        %v453 = vld [vmem:[#allocation3 + $0x78] sm:$0xff]
        %v454 = vld [vmem:[#allocation3 + $0x80] sm:$0xff]
        %v455 = vld [vmem:[#allocation3 + $0x88] sm:$0xff]
        %v456 = vld [vmem:[#allocation3 + $0x90] sm:$0xff]
        %v457 = vld [vmem:[#allocation3 + $0x98] sm:$0xff]
        %v458 = vld [vmem:[#allocation3 + $0xa0] sm:$0xff]
        %v459 = vld [vmem:[#allocation3 + $0xa8] sm:$0xff]
        %v460 = vld [vmem:[#allocation3 + $0xb0] sm:$0xff]
        %v461 = vld [vmem:[#allocation3 + $0xb8] sm:$0xff]
        %v462 = vld [vmem:[#allocation3 + $0xc0] sm:$0xff]
        %v463 = vld [vmem:[#allocation3 + $0xc8] sm:$0xff]
        %v464 = vld [vmem:[#allocation3 + $0xd0] sm:$0xff]
        %v465 = vld [vmem:[#allocation3 + $0xd8] sm:$0xff]
        %v466 = vld [vmem:[#allocation3 + $0xe0] sm:$0xff]
        %v467 = vld [vmem:[#allocation3 + $0xe8] sm:$0xff]
        %v468 = vld [vmem:[#allocation3 + $0xf0] sm:$0xff]
        %v469 = vld [vmem:[#allocation3 + $0xf8] sm:$0xff]
        %v470 = vld [vmem:[#allocation3 + $0x100] sm:$0xff]
        %v471 = vld [vmem:[#allocation3 + $0x108] sm:$0xff]
        %v472 = vld [vmem:[#allocation3 + $0x110] sm:$0xff]
        %v473 = vld [vmem:[#allocation3 + $0x118] sm:$0xff]
        %v474 = vld [vmem:[#allocation3 + $0x120] sm:$0xff]
        %v475 = vld [vmem:[#allocation3 + $0x128] sm:$0xff]
        %v476 = vld [vmem:[#allocation3 + $0x130] sm:$0xff]
        %v477 = vld [vmem:[#allocation3 + $0x138] sm:$0xff]
        %v478 = vld [vmem:[#allocation3 + $0x140] sm:$0xff]
        %v479 = vld [vmem:[#allocation3 + $0x148] sm:$0xff]
        %v480 = vld [vmem:[#allocation3 + $0x150] sm:$0xff]
        %v481 = vld [vmem:[#allocation3 + $0x158] sm:$0xff]
        %v482 = vld [vmem:[#allocation3 + $0x160] sm:$0xff]
        %v483 = vld [vmem:[#allocation3 + $0x168] sm:$0xff]
        %v484 = vld [vmem:[#allocation3 + $0x170] sm:$0xff]
        %v485 = vld [vmem:[#allocation3 + $0x178] sm:$0xff]
        %v486 = vld [vmem:[%s5] sm:$0x7]
        %v488 = vlaneseq
        %v489 = vshrl.u32 %v488, 7
        %v490 = vsub.s32 0, %v489
        %v491 = vrot.slane %v486, %v490
        %v492 = vlaneseq
        %v493 = vshrl.u32 %v492, 7
        %v494 = vsub.s32 1, %v493
        %v495 = vrot.slane %v486, %v494
        %v496 = vlaneseq
        %v497 = vshrl.u32 %v496, 7
        %v498 = vsub.s32 2, %v497
        %v499 = vrot.slane %v486, %v498
        %503 = vmatprep.subr.mxu0 %v439
        %504 = vmatpush1.msra.mxu0 %v438
        %505 = vmatprep.subr.mxu0 %v442
        %506 = vmatpush1.msra.mxu0 %v441
        %507 = vmatprep.subr.mxu0 %v445
        %508 = vmatpush1.msra.mxu0 %v444
        %509 = vmatprep.subr.mxu0 %v448
        %510 = vmatpush1.msra.mxu0 %v447
        %511 = vmatprep.subr.mxu0 %v451
        %512 = vmatpush1.msra.mxu0 %v450
        %513 = vmatprep.subr.mxu0 %v454
        %514 = vmatpush1.msra.mxu0 %v453
        %515 = vmatprep.subr.mxu0 %v457
        %516 = vmatpush1.msra.mxu0 %v456
        %517 = vmatprep.subr.mxu0 %v460
        %518 = vmatpush1.msra.mxu0 %v459
        %519 = vmatprep.subr.mxu0 %v463
        %520 = vmatpush1.msra.mxu0 %v462
        %521 = vmatprep.subr.mxu0 %v466
        %522 = vmatpush1.msra.mxu0 %v465
        %523 = vmatprep.subr.mxu0 %v469
        %524 = vmatpush1.msra.mxu0 %v468
        %525 = vmatprep.subr.mxu0 %v472
        %526 = vmatpush1.msra.mxu0 %v471
        %527 = vmatprep.subr.mxu0 %v475
        %528 = vmatpush1.msra.mxu0 %v474
        %529 = vmatprep.subr.mxu0 %v478
        %530 = vmatpush1.msra.mxu0 %v477
        %531 = vmatprep.subr.mxu0 %v481
        %532 = vmatpush1.msra.mxu0 %v480
        %533 = vmatprep.subr.mxu0 %v484
        %534 = vmatpush1.msra.mxu0 %v483
        %535 = vmatprep.subr.mxu0 0.0
        %536 = vmatpush1.msra.mxu0 0.0
        %537 = vmatprep.subr.mxu0 0.0
        %538 = vmatpush1.msra.mxu0 0.0
        %539 = vmatprep.subr.mxu0 0.0
        %540 = vmatpush1.msra.mxu0 0.0
        %541 = vmatprep.subr.mxu0 0.0
        %542 = vmatpush1.msra.mxu0 0.0
        %543 = vmatprep.subr.mxu0 0.0
        %544 = vmatpush1.msra.mxu0 0.0
        %545 = vmatprep.subr.mxu0 0.0
        %546 = vmatpush1.msra.mxu0 0.0
        %547 = vmatprep.subr.mxu0 0.0
        %548 = vmatpush1.msra.mxu0 0.0
        %549 = vmatprep.subr.mxu0 0.0
        %550 = vmatpush1.msra.mxu0 0.0
        %551 = vmatprep.subr.mxu0 0.0
        %552 = vmatpush1.msra.mxu0 0.0
        %553 = vmatprep.subr.mxu0 0.0
        %554 = vmatpush1.msra.mxu0 0.0
        %555 = vmatprep.subr.mxu0 0.0
        %556 = vmatpush1.msra.mxu0 0.0
        %557 = vmatprep.subr.mxu0 0.0
        %558 = vmatpush1.msra.mxu0 0.0
        %559 = vmatprep.subr.mxu0 0.0
        %560 = vmatpush1.msra.mxu0 0.0
        %561 = vmatprep.subr.mxu0 0.0
        %562 = vmatpush1.msra.mxu0 0.0
        %563 = vmatprep.subr.mxu0 0.0
        %564 = vmatpush1.msra.mxu0 0.0
        %565 = vmatprep.subr.mxu0 0.0
        %566 = vmatpush1.msra.mxu0 0.0
        %567 = vmatprep.mubr.f32.mxu0 0.0
        %568 = vmatmul.mubr.f32.gmra.mrb[0].mxu0 %v269
        %v569 = vpop.f32.mrb[0].mxu0
        %v570 = vadd.f32 %v491, %v569
        %v571 = vpop.f32.mrb[0].mxu0
        %v572 = vadd.f32 %v495, %v571
        %573 = vdwg.mxu0
        %574 = vmatprep.subr.mxu0 0.0
        %575 = vmatpush1.msra.mxu0 %v440
        %576 = vmatprep.subr.mxu0 0.0
        %577 = vmatpush1.msra.mxu0 %v443
        %578 = vmatprep.subr.mxu0 0.0
        %579 = vmatpush1.msra.mxu0 %v446
        %580 = vmatprep.subr.mxu0 0.0
        %581 = vmatpush1.msra.mxu0 %v449
        %582 = vmatprep.subr.mxu0 0.0
        %583 = vmatpush1.msra.mxu0 %v452
        %584 = vmatprep.subr.mxu0 0.0
        %585 = vmatpush1.msra.mxu0 %v455
        %586 = vmatprep.subr.mxu0 0.0
        %587 = vmatpush1.msra.mxu0 %v458
        %588 = vmatprep.subr.mxu0 0.0
        %589 = vmatpush1.msra.mxu0 %v461
        %590 = vmatprep.subr.mxu0 0.0
        %591 = vmatpush1.msra.mxu0 %v464
        %592 = vmatprep.subr.mxu0 0.0
        %593 = vmatpush1.msra.mxu0 %v467
        %594 = vmatprep.subr.mxu0 0.0
        %595 = vmatpush1.msra.mxu0 %v470
        %596 = vmatprep.subr.mxu0 0.0
        %597 = vmatpush1.msra.mxu0 %v473
        %598 = vmatprep.subr.mxu0 0.0
        %599 = vmatpush1.msra.mxu0 %v476
        %600 = vmatprep.subr.mxu0 0.0
        %601 = vmatpush1.msra.mxu0 %v479
        %602 = vmatprep.subr.mxu0 0.0
        %603 = vmatpush1.msra.mxu0 %v482
        %604 = vmatprep.subr.mxu0 0.0
        %605 = vmatpush1.msra.mxu0 %v485
        %606 = vmatprep.subr.mxu0 0.0
        %607 = vmatpush1.msra.mxu0 0.0
        %608 = vmatprep.subr.mxu0 0.0
        %609 = vmatpush1.msra.mxu0 0.0
        %610 = vmatprep.subr.mxu0 0.0
        %611 = vmatpush1.msra.mxu0 0.0
        %612 = vmatprep.subr.mxu0 0.0
        %613 = vmatpush1.msra.mxu0 0.0
        %614 = vmatprep.subr.mxu0 0.0
        %615 = vmatpush1.msra.mxu0 0.0
        %616 = vmatprep.subr.mxu0 0.0
        %617 = vmatpush1.msra.mxu0 0.0
        %618 = vmatprep.subr.mxu0 0.0
        %619 = vmatpush1.msra.mxu0 0.0
        %620 = vmatprep.subr.mxu0 0.0
        %621 = vmatpush1.msra.mxu0 0.0
        %622 = vmatprep.subr.mxu0 0.0
        %623 = vmatpush1.msra.mxu0 0.0
        %624 = vmatprep.subr.mxu0 0.0
        %625 = vmatpush1.msra.mxu0 0.0
        %626 = vmatprep.subr.mxu0 0.0
        %627 = vmatpush1.msra.mxu0 0.0
        %628 = vmatprep.subr.mxu0 0.0
        %629 = vmatpush1.msra.mxu0 0.0
        %630 = vmatprep.subr.mxu0 0.0
        %631 = vmatpush1.msra.mxu0 0.0
        %632 = vmatprep.subr.mxu0 0.0
        %633 = vmatpush1.msra.mxu0 0.0
        %634 = vmatprep.subr.mxu0 0.0
        %635 = vmatpush1.msra.mxu0 0.0
        %636 = vmatprep.subr.mxu0 0.0
        %637 = vmatpush1.msra.mxu0 0.0
        %638 = vmatprep.mubr.f32.mxu0 0.0
        %639 = vmatmul.mubr.f32.gmra.mrb[0].mxu0 %v269
        %v640 = vpop.f32.mrb[0].mxu0
        %v641 = vadd.f32 %v499, %v640
        %v642 = vpop.f32.mrb[0].mxu0
        %643 = vdwg.mxu0
        %v644 = vadd.f32 %v364, %v570
        %v645 = vxor.u32 %v644, 2147483648
        %v646 = vmul.f32 %v645, 1.442695
        %v647 = vpow.pop %v646
        %v648 = vadd.f32 %v647, 1.0
        %v649 = vrcp.pop %v648
        %v650 = vmul.f32 1.0, %v649
        %v651 = vadd.f32 %v366, %v572
        %v652 = vxor.u32 %v651, 2147483648
        %v653 = vmul.f32 %v652, 1.442695
        %v654 = vpow.pop %v653
        %v655 = vadd.f32 %v654, 1.0
        %v656 = vrcp.pop %v655
        %v657 = vmul.f32 1.0, %v656
        %v658 = vmul.f32 %v650, %v641
        %v659 = vadd.f32 %v435, %v658
        %v660 = vtanh.pop %v659
        %v661 = vsub.f32 1.0, %v657
        %v662 = vmul.f32 %v661, %v660
        %v663 = vmul.f32 %v657, %v269
        %v664 = vadd.f32 %v662, %v663
        %665 = vst [vmem:[#allocation2] sm:$0xff] %v664
        %666 = vst [vmem:[%s261] sm:$0xff] %v664
        %p667 = scmp.lt.s32.totalorder %s18, 7
        %s668 = scalar_select %p667, %s18, 7
        %s669 = smul.addr %s668, 8
        %s670 = scalar_lea.vmem %s6, %s669
        // Predicated region
        $region53: #{encoder_forward.1} parent=43 // pred_check
          %p671 = pneg %p167
        $region54: #{encoder_forward.1} parent=43 // pred_check_branch
          %673 = sbr.rel (%p671) target = $region56
        $region55: #{encoder_forward.1} parent=43 // pred_region
          _
        $region56: #{encoder_forward.1} parent=43 // pred_fallthru
          _
      $region44: #{encoder_forward.1} parent=5 // pred_fallthru
        _
      %p674 = scmp.le.s32.totalorder 2, %s13
      // Predicated region
      $region57: #{encoder_forward.1} parent=5 // pred_check
        %p675 = pneg %p674
      $region58: #{encoder_forward.1} parent=5 // pred_check_branch
        %677 = sbr.rel (%p675) target = $region60
      $region59: #{encoder_forward.1} parent=5 // pred_region
        %s678 = ssub.s32 %s13, 2
        // Predicated region
        $region61: #{encoder_forward.1} parent=59 // pred_check
          %p679 = pneg %p173
        $region62: #{encoder_forward.1} parent=59 // pred_check_branch
          %681 = sbr.rel (%p679) target = $region64
        $region63: #{encoder_forward.1} parent=59 // pred_region
          %p682 = scmp.lt.s32.totalorder %s19, 7
          %s683 = scalar_select %p682, %s19, 7
          %s684 = smul.addr %s683, 8
          %s685 = scalar_lea.vmem %s6, %s684
        $region64: #{encoder_forward.1} parent=59 // pred_fallthru
          _
      $region60: #{encoder_forward.1} parent=5 // pred_fallthru
        _
    $region6: #{encoder_forward.1} parent=1 // loop_footer
      %s17 = sadd.s32 1, %s13
    $region7: #{encoder_forward.1} parent=1 // loop_footer_branch
      %12 = sbr.rel target = $region3
    $region8: #{encoder_forward.1} parent=1 // loop_exit
      _
    %686 = vsyncpa [#allocation4], 1
    %s687 = scalar_lea.sflag [#allocation4], 1
    %688 = vsyncpa %s687, 1

</llo_original>
